<compile_context>
chip_gen: v5e
topology: v5e:2x2
jax: 0.10.0
libtpu: 0.0.40
codegen_flags: <defaults>
</compile_context>

<pallas_src>
from functools import partial

import jax
import jax.numpy as jnp
from jax import lax
from jax.experimental import pallas as pl
from jax.experimental.pallas import tpu as pltpu


EMB_DIM = 128
SEQ = 6                       # DependencyModel flattens 6 embeddings per example
HIDDEN = 128
_MAX_TM = 1024                # batch-tile cap; per-tile VMEM is ~a few MB, far
                              # under every generation's scoped-VMEM default


def _round_up(x, m):
    return ((x + m - 1) // m) * m


def _fused_kernel(ids_ref, tabs_ref, b1_ref, w2_ref, b2_ref, o_ref):
    # ids_ref:  (tm, 6)            int32  VMEM  token ids for this batch tile
    # tabs_ref: (6, Vpad, 128)     bf16   folded per-position tables T_j = emb @ W1_j.T
    # b1_ref:   (1, 128)           f32
    # w2_ref:   (128, Npad)        bf16   output_layer.weight, pre-transposed + padded
    # b2_ref:   (1, Npad)          f32
    # o_ref:    (tm, Npad)         f32    logits tile (lane-dense)
    tm = o_ref.shape[0]
    v_pad = tabs_ref.shape[1]

    ids = ids_ref[...]                                            # (tm, 6) int32
    iota_v = lax.broadcasted_iota(jnp.int32, (tm, v_pad), 1)      # hoisted out of loop

    # hidden = sum_j onehot(ids[:, j]) @ T_j  -- embedding gather + Linear(768,128)
    # fused onto the MXU.  Out-of-range ids match nothing -> zero contribution.
    h = jnp.zeros((tm, HIDDEN), jnp.float32)
    for j in range(SEQ):                                          # static unroll of 6
        onehot = (iota_v == ids[:, j:j + 1]).astype(jnp.bfloat16)  # (tm, Vpad)
        h = h + jnp.dot(onehot, tabs_ref[j],
                        preferred_element_type=jnp.float32)

    h = jnp.maximum(h + b1_ref[...], 0.0)                         # bias + ReLU

    out = jnp.dot(h.astype(jnp.bfloat16), w2_ref[...],
                  preferred_element_type=jnp.float32)
    o_ref[...] = (out + b2_ref[...]).astype(o_ref.dtype)


def prepare_params(emb_table, w1, b1, w2, b2):
    """One-time parameter prep: fold embedding into W1, pad, cast to bf16."""
    word_types = emb_table.shape[0]
    outputs = w2.shape[0]
    v_pad = _round_up(word_types, 128)
    n_pad = _round_up(outputs, 128)

    # Fold: T_j[v, h] = sum_e emb[v, e] * W1[h, j*128 + e]   (computed in f32)
    emb_f32 = emb_table.astype(jnp.float32)                        # (vocab, 128)
    w1_f32 = w1.astype(jnp.float32).reshape(HIDDEN, SEQ, EMB_DIM)  # (128, 6, 128)
    tabs = jnp.einsum("ve,hse->svh", emb_f32, w1_f32)              # (6, vocab, 128)
    tabs_p = jnp.zeros((SEQ, v_pad, HIDDEN), jnp.bfloat16)
    tabs_p = tabs_p.at[:, :word_types, :].set(tabs.astype(jnp.bfloat16))

    b1_2d = b1.reshape(1, HIDDEN).astype(jnp.float32)              # (1, 128)
    w2_p = jnp.zeros((HIDDEN, n_pad), jnp.bfloat16)
    w2_p = w2_p.at[:, :outputs].set(w2.T.astype(jnp.bfloat16))     # (128, Npad)
    b2_p = jnp.zeros((1, n_pad), jnp.float32)
    b2_p = b2_p.at[0, :outputs].set(b2.astype(jnp.float32))        # (1, Npad)
    return tabs_p, b1_2d, w2_p, b2_p


@partial(jax.jit, static_argnames=("outputs",))
def dependency_model_forward(inputs, tabs_p, b1_2d, w2_p, b2_p, *, outputs):
    """inputs: (B, 6) int32 token ids.  Returns logits (B, outputs) float32."""
    B = inputs.shape[0]
    n_pad = w2_p.shape[1]
    v_pad = tabs_p.shape[1]

    # Batch tile: multiple of 8 sublanes, capped at _MAX_TM, and chosen so the
    # grid has >=2 steps whenever B allows it (keeps both v7x TensorCores busy;
    # harmless ~0.35us extra step overhead on single-core v5e/v6e).
    tm = min(_MAX_TM, max(8, _round_up(pl.cdiv(B, 2), 8)))
    b_pad = _round_up(B, tm)

    ids = inputs.astype(jnp.int32)
    if b_pad != B:
        ids = jnp.pad(ids, ((0, b_pad - B), (0, 0)))   # pad with token 0 (valid row)

    out = pl.pallas_call(
        _fused_kernel,
        out_shape=jax.ShapeDtypeStruct((b_pad, n_pad), jnp.float32),
        grid_spec=pltpu.PrefetchScalarGridSpec(
            num_scalar_prefetch=0,
            grid=(b_pad // tm,),
            in_specs=[
                pl.BlockSpec((tm, SEQ), lambda i: (i, 0)),                # ids tile
                pl.BlockSpec((SEQ, v_pad, HIDDEN), lambda i: (0, 0, 0)),  # folded tables
                pl.BlockSpec((1, HIDDEN), lambda i: (0, 0)),              # b1
                pl.BlockSpec((HIDDEN, n_pad), lambda i: (0, 0)),          # W2^T padded
                pl.BlockSpec((1, n_pad), lambda i: (0, 0)),               # b2 padded
            ],
            out_specs=pl.BlockSpec((tm, n_pad), lambda i: (i, 0)),
        ),
        compiler_params=pltpu.CompilerParams(
            dimension_semantics=("parallel",)),
    )(ids, tabs_p, b1_2d, w2_p, b2_p)

    return out[:B, :outputs]


def _reference_forward(inputs, emb_table, w1, b1, w2, b2):
    embedded = jnp.take(emb_table, inputs, axis=0)
    x = embedded.reshape(inputs.shape[0], -1)
    h = jnp.maximum(x @ w1.T + b1, 0.0)
    return h @ w2.T + b2


if __name__ == "__main__":
    word_types = 50
    outputs = 64
    batch = 8

    key = jax.random.PRNGKey(0)
    k_emb, k_w1, k_b1, k_w2, k_b2, k_in = jax.random.split(key, 6)

    # Deterministic synthetic parameters (shapes match the nn.Module __init__).
    emb_table = jax.random.normal(k_emb, (word_types, EMB_DIM), jnp.float32) * 0.1
    w1 = jax.random.normal(k_w1, (HIDDEN, SEQ * EMB_DIM), jnp.float32) * 0.02
    b1 = jax.random.normal(k_b1, (HIDDEN,), jnp.float32) * 0.01
    w2 = jax.random.normal(k_w2, (outputs, HIDDEN), jnp.float32) * 0.02
    b2 = jax.random.normal(k_b2, (outputs,), jnp.float32) * 0.01

    inputs = jax.random.randint(k_in, (batch, SEQ), 0, word_types, jnp.int32)

    params = prepare_params(emb_table, w1, b1, w2, b2)
    logits = dependency_model_forward(inputs, *params, outputs=outputs)
    logits = jax.block_until_ready(logits)

    ref = _reference_forward(inputs, emb_table, w1, b1, w2, b2)
    assert logits.shape == (batch, outputs)
    # bf16 folded tables / matmul inputs (f32 accumulation) -> small rounding
    # vs. the pure-f32 reference.
    assert jnp.allclose(logits, ref, atol=5e-3, rtol=5e-3), \
        f"max abs diff {jnp.max(jnp.abs(logits - ref))}"

    print("KERNEL_OK")
</pallas_src>

<mosaic_0001>
module attributes {stable_mosaic.version = 11 : i64} {
  func.func @_fused_kernel(%arg0: i32, %arg1: memref<8x6xi32, #tpu.memory_space<vmem>>, %arg2: memref<6x128x128xbf16, #tpu.memory_space<vmem>>, %arg3: memref<1x128xf32, #tpu.memory_space<vmem>>, %arg4: memref<128x128xbf16, #tpu.memory_space<vmem>>, %arg5: memref<1x128xf32, #tpu.memory_space<vmem>>, %arg6: memref<8x128xf32, #tpu.memory_space<vmem>>) attributes {dimension_semantics = [#tpu.dimension_semantics<parallel>], iteration_bounds = array<i64: 1>, scalar_prefetch = 0 : i64, scratch_operands = 0 : i64, tpu.core_type = #tpu.core_type<tc>, window_params = [{transform_indices = @transform_0, window_bounds = array<i64: 8, 6>}, {pipeline_mode = #tpu.pipeline_mode<synchronous>, transform_indices = @transform_1, window_bounds = array<i64: 6, 128, 128>}, {pipeline_mode = #tpu.pipeline_mode<synchronous>, transform_indices = @transform_2, window_bounds = array<i64: 1, 128>}, {pipeline_mode = #tpu.pipeline_mode<synchronous>, transform_indices = @transform_3, window_bounds = array<i64: 128, 128>}, {pipeline_mode = #tpu.pipeline_mode<synchronous>, transform_indices = @transform_4, window_bounds = array<i64: 1, 128>}, {transform_indices = @transform_5, window_bounds = array<i64: 8, 128>}]} {
    %c0 = arith.constant 0 : index
    %c0_0 = arith.constant 0 : index
    %0 = vector.load %arg1[%c0, %c0_0] : memref<8x6xi32, #tpu.memory_space<vmem>>, vector<8x6xi32>
    %1 = tpu.iota {dimensions = array<i32: 1>} : vector<8x128xi32>
    %cst = arith.constant 0.000000e+00 : f32
    %2 = vector.broadcast %cst : f32 to vector<8x128xf32>
    %3 = vector.extract_strided_slice %0 {offsets = [0, 0], sizes = [8, 1], strides = [1, 1]} : vector<8x6xi32> to vector<8x1xi32>
    %4 = vector.broadcast %3 : vector<8x1xi32> to vector<8x128xi32>
    %5 = arith.cmpi eq, %1, %4 : vector<8x128xi32>
    %6 = arith.extui %5 : vector<8x128xi1> to vector<8x128xi32>
    %7 = arith.sitofp %6 : vector<8x128xi32> to vector<8x128xf32>
    %8 = arith.truncf %7 : vector<8x128xf32> to vector<8x128xbf16>
    %c0_1 = arith.constant 0 : index
    %c0_2 = arith.constant 0 : index
    %c0_3 = arith.constant 0 : index
    %9 = vector.load %arg2[%c0_1, %c0_2, %c0_3] : memref<6x128x128xbf16, #tpu.memory_space<vmem>>, vector<1x128x128xbf16>
    %10 = vector.shape_cast %9 : vector<1x128x128xbf16> to vector<128x128xbf16>
    %cst_4 = arith.constant dense<0.000000e+00> : vector<8x128xf32>
    %11 = tpu.matmul %8, %10, %cst_4 {dimension_numbers = #tpu.dot_dimension_numbers<[1], [0], [0], [1], [0, 0, 1, 1], [], []>} : vector<8x128xbf16>, vector<128x128xbf16>, vector<8x128xf32> -> vector<8x128xf32>
    %12 = arith.addf %2, %11 : vector<8x128xf32>
    %13 = vector.extract_strided_slice %0 {offsets = [0, 1], sizes = [8, 1], strides = [1, 1]} : vector<8x6xi32> to vector<8x1xi32>
    %14 = vector.broadcast %13 : vector<8x1xi32> to vector<8x128xi32>
    %15 = arith.cmpi eq, %1, %14 : vector<8x128xi32>
    %16 = arith.extui %15 : vector<8x128xi1> to vector<8x128xi32>
    %17 = arith.sitofp %16 : vector<8x128xi32> to vector<8x128xf32>
    %18 = arith.truncf %17 : vector<8x128xf32> to vector<8x128xbf16>
    %c1 = arith.constant 1 : index
    %c0_5 = arith.constant 0 : index
    %c0_6 = arith.constant 0 : index
    %19 = vector.load %arg2[%c1, %c0_5, %c0_6] : memref<6x128x128xbf16, #tpu.memory_space<vmem>>, vector<1x128x128xbf16>
    %20 = vector.shape_cast %19 : vector<1x128x128xbf16> to vector<128x128xbf16>
    %cst_7 = arith.constant dense<0.000000e+00> : vector<8x128xf32>
    %21 = tpu.matmul %18, %20, %cst_7 {dimension_numbers = #tpu.dot_dimension_numbers<[1], [0], [0], [1], [0, 0, 1, 1], [], []>} : vector<8x128xbf16>, vector<128x128xbf16>, vector<8x128xf32> -> vector<8x128xf32>
    %22 = arith.addf %12, %21 : vector<8x128xf32>
    %23 = vector.extract_strided_slice %0 {offsets = [0, 2], sizes = [8, 1], strides = [1, 1]} : vector<8x6xi32> to vector<8x1xi32>
    %24 = vector.broadcast %23 : vector<8x1xi32> to vector<8x128xi32>
    %25 = arith.cmpi eq, %1, %24 : vector<8x128xi32>
    %26 = arith.extui %25 : vector<8x128xi1> to vector<8x128xi32>
    %27 = arith.sitofp %26 : vector<8x128xi32> to vector<8x128xf32>
    %28 = arith.truncf %27 : vector<8x128xf32> to vector<8x128xbf16>
    %c2 = arith.constant 2 : index
    %c0_8 = arith.constant 0 : index
    %c0_9 = arith.constant 0 : index
    %29 = vector.load %arg2[%c2, %c0_8, %c0_9] : memref<6x128x128xbf16, #tpu.memory_space<vmem>>, vector<1x128x128xbf16>
    %30 = vector.shape_cast %29 : vector<1x128x128xbf16> to vector<128x128xbf16>
    %cst_10 = arith.constant dense<0.000000e+00> : vector<8x128xf32>
    %31 = tpu.matmul %28, %30, %cst_10 {dimension_numbers = #tpu.dot_dimension_numbers<[1], [0], [0], [1], [0, 0, 1, 1], [], []>} : vector<8x128xbf16>, vector<128x128xbf16>, vector<8x128xf32> -> vector<8x128xf32>
    %32 = arith.addf %22, %31 : vector<8x128xf32>
    %33 = vector.extract_strided_slice %0 {offsets = [0, 3], sizes = [8, 1], strides = [1, 1]} : vector<8x6xi32> to vector<8x1xi32>
    %34 = vector.broadcast %33 : vector<8x1xi32> to vector<8x128xi32>
    %35 = arith.cmpi eq, %1, %34 : vector<8x128xi32>
    %36 = arith.extui %35 : vector<8x128xi1> to vector<8x128xi32>
    %37 = arith.sitofp %36 : vector<8x128xi32> to vector<8x128xf32>
    %38 = arith.truncf %37 : vector<8x128xf32> to vector<8x128xbf16>
    %c3 = arith.constant 3 : index
    %c0_11 = arith.constant 0 : index
    %c0_12 = arith.constant 0 : index
    %39 = vector.load %arg2[%c3, %c0_11, %c0_12] : memref<6x128x128xbf16, #tpu.memory_space<vmem>>, vector<1x128x128xbf16>
    %40 = vector.shape_cast %39 : vector<1x128x128xbf16> to vector<128x128xbf16>
    %cst_13 = arith.constant dense<0.000000e+00> : vector<8x128xf32>
    %41 = tpu.matmul %38, %40, %cst_13 {dimension_numbers = #tpu.dot_dimension_numbers<[1], [0], [0], [1], [0, 0, 1, 1], [], []>} : vector<8x128xbf16>, vector<128x128xbf16>, vector<8x128xf32> -> vector<8x128xf32>
    %42 = arith.addf %32, %41 : vector<8x128xf32>
    %43 = vector.extract_strided_slice %0 {offsets = [0, 4], sizes = [8, 1], strides = [1, 1]} : vector<8x6xi32> to vector<8x1xi32>
    %44 = vector.broadcast %43 : vector<8x1xi32> to vector<8x128xi32>
    %45 = arith.cmpi eq, %1, %44 : vector<8x128xi32>
    %46 = arith.extui %45 : vector<8x128xi1> to vector<8x128xi32>
    %47 = arith.sitofp %46 : vector<8x128xi32> to vector<8x128xf32>
    %48 = arith.truncf %47 : vector<8x128xf32> to vector<8x128xbf16>
    %c4 = arith.constant 4 : index
    %c0_14 = arith.constant 0 : index
    %c0_15 = arith.constant 0 : index
    %49 = vector.load %arg2[%c4, %c0_14, %c0_15] : memref<6x128x128xbf16, #tpu.memory_space<vmem>>, vector<1x128x128xbf16>
    %50 = vector.shape_cast %49 : vector<1x128x128xbf16> to vector<128x128xbf16>
    %cst_16 = arith.constant dense<0.000000e+00> : vector<8x128xf32>
    %51 = tpu.matmul %48, %50, %cst_16 {dimension_numbers = #tpu.dot_dimension_numbers<[1], [0], [0], [1], [0, 0, 1, 1], [], []>} : vector<8x128xbf16>, vector<128x128xbf16>, vector<8x128xf32> -> vector<8x128xf32>
    %52 = arith.addf %42, %51 : vector<8x128xf32>
    %53 = vector.extract_strided_slice %0 {offsets = [0, 5], sizes = [8, 1], strides = [1, 1]} : vector<8x6xi32> to vector<8x1xi32>
    %54 = vector.broadcast %53 : vector<8x1xi32> to vector<8x128xi32>
    %55 = arith.cmpi eq, %1, %54 : vector<8x128xi32>
    %56 = arith.extui %55 : vector<8x128xi1> to vector<8x128xi32>
    %57 = arith.sitofp %56 : vector<8x128xi32> to vector<8x128xf32>
    %58 = arith.truncf %57 : vector<8x128xf32> to vector<8x128xbf16>
    %c5 = arith.constant 5 : index
    %c0_17 = arith.constant 0 : index
    %c0_18 = arith.constant 0 : index
    %59 = vector.load %arg2[%c5, %c0_17, %c0_18] : memref<6x128x128xbf16, #tpu.memory_space<vmem>>, vector<1x128x128xbf16>
    %60 = vector.shape_cast %59 : vector<1x128x128xbf16> to vector<128x128xbf16>
    %cst_19 = arith.constant dense<0.000000e+00> : vector<8x128xf32>
    %61 = tpu.matmul %58, %60, %cst_19 {dimension_numbers = #tpu.dot_dimension_numbers<[1], [0], [0], [1], [0, 0, 1, 1], [], []>} : vector<8x128xbf16>, vector<128x128xbf16>, vector<8x128xf32> -> vector<8x128xf32>
    %62 = arith.addf %52, %61 : vector<8x128xf32>
    %c0_20 = arith.constant 0 : index
    %c0_21 = arith.constant 0 : index
    %63 = vector.load %arg3[%c0_20, %c0_21] : memref<1x128xf32, #tpu.memory_space<vmem>>, vector<1x128xf32>
    %64 = vector.broadcast %63 : vector<1x128xf32> to vector<8x128xf32>
    %65 = arith.addf %62, %64 : vector<8x128xf32>
    %cst_22 = arith.constant 0.000000e+00 : f32
    %66 = vector.broadcast %cst_22 : f32 to vector<8x128xf32>
    %67 = arith.maximumf %65, %66 : vector<8x128xf32>
    %68 = arith.truncf %67 : vector<8x128xf32> to vector<8x128xbf16>
    %c0_23 = arith.constant 0 : index
    %c0_24 = arith.constant 0 : index
    %69 = vector.load %arg4[%c0_23, %c0_24] : memref<128x128xbf16, #tpu.memory_space<vmem>>, vector<128x128xbf16>
    %cst_25 = arith.constant dense<0.000000e+00> : vector<8x128xf32>
    %70 = tpu.matmul %68, %69, %cst_25 {dimension_numbers = #tpu.dot_dimension_numbers<[1], [0], [0], [1], [0, 0, 1, 1], [], []>} : vector<8x128xbf16>, vector<128x128xbf16>, vector<8x128xf32> -> vector<8x128xf32>
    %c0_26 = arith.constant 0 : index
    %c0_27 = arith.constant 0 : index
    %71 = vector.load %arg5[%c0_26, %c0_27] : memref<1x128xf32, #tpu.memory_space<vmem>>, vector<1x128xf32>
    %72 = vector.broadcast %71 : vector<1x128xf32> to vector<8x128xf32>
    %73 = arith.addf %70, %72 : vector<8x128xf32>
    %c0_28 = arith.constant 0 : index
    %c0_29 = arith.constant 0 : index
    %74 = vector.load %arg6[%c0_28, %c0_29] : memref<8x128xf32, #tpu.memory_space<vmem>>, vector<8x128xf32>
    tpu.vector_store %arg6[%c0_28, %c0_29], %73 {strides = array<i32>} : memref<8x128xf32, #tpu.memory_space<vmem>>, vector<8x128xf32>,
    return
  }
  func.func @transform_0(%arg0: i32) -> (i32, i32) {
    %c0_i32 = arith.constant 0 : i32
    %c0_i32_0 = arith.constant 0 : i32
    return %arg0, %c0_i32 : i32, i32
  }
  func.func @transform_1(%arg0: i32) -> (i32, i32, i32) {
    %c0_i32 = arith.constant 0 : i32
    %c0_i32_0 = arith.constant 0 : i32
    %c0_i32_1 = arith.constant 0 : i32
    %c0_i32_2 = arith.constant 0 : i32
    return %c0_i32, %c0_i32_0, %c0_i32_1 : i32, i32, i32
  }
  func.func @transform_2(%arg0: i32) -> (i32, i32) {
    %c0_i32 = arith.constant 0 : i32
    %c0_i32_0 = arith.constant 0 : i32
    %c0_i32_1 = arith.constant 0 : i32
    return %c0_i32, %c0_i32_0 : i32, i32
  }
  func.func @transform_3(%arg0: i32) -> (i32, i32) {
    %c0_i32 = arith.constant 0 : i32
    %c0_i32_0 = arith.constant 0 : i32
    %c0_i32_1 = arith.constant 0 : i32
    return %c0_i32, %c0_i32_0 : i32, i32
  }
  func.func @transform_4(%arg0: i32) -> (i32, i32) {
    %c0_i32 = arith.constant 0 : i32
    %c0_i32_0 = arith.constant 0 : i32
    %c0_i32_1 = arith.constant 0 : i32
    return %c0_i32, %c0_i32_0 : i32, i32
  }
  func.func @transform_5(%arg0: i32) -> (i32, i32) {
    %c0_i32 = arith.constant 0 : i32
    %c0_i32_0 = arith.constant 0 : i32
    return %arg0, %c0_i32 : i32, i32
  }
}

</mosaic_0001>

<llo_original>
// kernel: dependency_model_forward.1
$region0: #{dependency_model_forward.1}
  #allocation0 [shape = 'u32[]', space=smem, size = 0x4, offset = 0x4, fixed_abs, tag = 'smem constant byte address 0x4 - core index']
  #allocation1 [shape = 'u32[72,128]{1,0:T(1,128)}', space=vmem, size = 0x9000, scoped, tag = 'internal scratch']
  %s0 = inlined_call_operand.hbm [shape: s32[8,6], index: 0, kind: input, shape index: {}]
  %s1 = inlined_call_operand.hbm [shape: bf16[6,128,128], index: 1, kind: input, shape index: {}]
  %s2 = inlined_call_operand.vmem [shape: f32[1,128], index: 2, kind: input, shape index: {}]
  %s3 = inlined_call_operand.hbm [shape: bf16[128,128], index: 3, kind: input, shape index: {}]
  %s4 = inlined_call_operand.vmem [shape: f32[1,128], index: 4, kind: input, shape index: {}]
  %s5 = inlined_call_operand.hbm [shape: f32[8,128], index: 5, kind: output, shape index: {}]
  %s6 = sld [smem:[#allocation0]]
  $region42: #{dependency_model_forward.1} parent=0
    _
  %s8 = ssub.s32 1, %s6
  %s9 = scalar_select 0, %s8, %s6
  $region1: #{dependency_model_forward.1} parent=0
    #allocation2 [shape = 'u8[4096]{0}', space=vmem, size = 0x1000, scoped, tag = 'input window, operand 0, single buffered']
    #allocation3 [shape = 's32[1]{0}', space=sflag, size = 0x4, scoped, tag = 'scoped memory for dependency_model_forward.1']
    #allocation4 [shape = 's32[1]{0}', space=sflag, size = 0x4, scoped, tag = 'scoped memory for dependency_model_forward.1']
    #allocation5 [shape = 'u8[196608]{0}', space=vmem, size = 0x30000, scoped, tag = 'input window, operand 1, single buffered']
    #allocation6 [shape = 's32[1]{0}', space=sflag, size = 0x4, scoped, tag = 'scoped memory for dependency_model_forward.1']
    #allocation7 [shape = 'u8[32768]{0}', space=vmem, size = 0x8000, scoped, tag = 'input window, operand 3, single buffered']
    #allocation8 [shape = 'u8[4096]{0}', space=vmem, size = 0x1000, scoped, tag = 'output window, operand 0, single buffered']
    %10 = vsyncpa [#allocation3], 0
    %11 = vsyncpa [#allocation6], 0
    %12 = vsyncpa [#allocation4], 0
    // Predicated region
    $region2: #{dependency_model_forward.1} parent=1 // pred_check
      _
    $region3: #{dependency_model_forward.1} parent=1 // pred_check_branch
      %14 = sbr.rel (0) target = $region5
    $region4: #{dependency_model_forward.1} parent=1 // pred_region
      %16 = vsyncadd [#allocation3], 0
      %s18 = sshll.u32 %s0, 4
      %s19 = int_to_ptr.hbm [resolvable:$true] %s18
      %s20 = sshll.u32 [#allocation2], 4
      %s21 = int_to_ptr.vmem [resolvable:$true] %s20
      %23 = dma.hbm_to_vmem [thread:$0]  %s19, 128, %s21, [#allocation3]
    $region5: #{dependency_model_forward.1} parent=1 // pred_fallthru
      _
    // Predicated region
    $region6: #{dependency_model_forward.1} parent=1 // pred_check
      _
    $region7: #{dependency_model_forward.1} parent=1 // pred_check_branch
      %25 = sbr.rel (0) target = $region9
    $region8: #{dependency_model_forward.1} parent=1 // pred_region
      %27 = vsyncadd [#allocation6], 0
      %s28 = sshll.u32 %s1, 4
      %s29 = int_to_ptr.hbm [resolvable:$true] %s28
      %s30 = sshll.u32 [#allocation5], 4
      %s31 = int_to_ptr.vmem [resolvable:$true] %s30
      %36 = dma.hbm_to_vmem [thread:$0]  %s29, 6144, %s31, [#allocation6], 64, 64, 4
    $region9: #{dependency_model_forward.1} parent=1 // pred_fallthru
      _
    // Predicated region
    $region10: #{dependency_model_forward.1} parent=1 // pred_check
      _
    $region11: #{dependency_model_forward.1} parent=1 // pred_check_branch
      %38 = sbr.rel (0) target = $region13
    $region12: #{dependency_model_forward.1} parent=1 // pred_region
      _
    $region13: #{dependency_model_forward.1} parent=1 // pred_fallthru
      _
    // Predicated region
    $region14: #{dependency_model_forward.1} parent=1 // pred_check
      _
    $region15: #{dependency_model_forward.1} parent=1 // pred_check_branch
      %40 = sbr.rel (0) target = $region17
    $region16: #{dependency_model_forward.1} parent=1 // pred_region
      %42 = vsyncadd [#allocation6], 0
      %s43 = sshll.u32 %s3, 4
      %s44 = int_to_ptr.hbm [resolvable:$true] %s43
      %s45 = sshll.u32 [#allocation7], 4
      %s46 = int_to_ptr.vmem [resolvable:$true] %s45
      %51 = dma.hbm_to_vmem [thread:$0]  %s44, 1024, %s46, [#allocation6], 64, 64, 4
    $region17: #{dependency_model_forward.1} parent=1 // pred_fallthru
      _
    // Predicated region
    $region18: #{dependency_model_forward.1} parent=1 // pred_check
      _
    $region19: #{dependency_model_forward.1} parent=1 // pred_check_branch
      %53 = sbr.rel (0) target = $region21
    $region20: #{dependency_model_forward.1} parent=1 // pred_region
      _
    $region21: #{dependency_model_forward.1} parent=1 // pred_fallthru
      _
    // Predicated region
    $region22: #{dependency_model_forward.1} parent=1 // pred_check
      _
    $region23: #{dependency_model_forward.1} parent=1 // pred_check_branch
      %55 = sbr.rel (0) target = $region25
    $region24: #{dependency_model_forward.1} parent=1 // pred_region
      %57 = dma.done [#allocation3], 128
    $region25: #{dependency_model_forward.1} parent=1 // pred_fallthru
      _
    // Predicated region
    $region26: #{dependency_model_forward.1} parent=1 // pred_check
      _
    $region27: #{dependency_model_forward.1} parent=1 // pred_check_branch
      %59 = sbr.rel (0) target = $region29
    $region28: #{dependency_model_forward.1} parent=1 // pred_region
      %61 = dma.done [#allocation6], 6144
    $region29: #{dependency_model_forward.1} parent=1 // pred_fallthru
      _
    // Predicated region
    $region30: #{dependency_model_forward.1} parent=1 // pred_check
      _
    $region31: #{dependency_model_forward.1} parent=1 // pred_check_branch
      %63 = sbr.rel (0) target = $region33
    $region32: #{dependency_model_forward.1} parent=1 // pred_region
      %65 = dma.done [#allocation6], 1024
    $region33: #{dependency_model_forward.1} parent=1 // pred_fallthru
      _
    %v66 = vld [vmem:[#allocation2] sm:$0xff]
    %v67 = vlaneseq
    %v68 = vand.u32 %v67, 127
    %69 = vset.pattern.permute.xlu0 0
    %70 = vperm.xlu0 %69, %v66
    %v71 = vpop.permute.xlu0 %70
    %vm72 = vcmp.eq.s32.totalorder %v68, %v71
    %v73 = vsel %vm72, 1, 0
    %v74 = vcvt.s32.f32 %v73
    %v75 = vpack.c.bf16 %v74, %v74
    %v76 = vld [vmem:[#allocation5] sm:$0xf]
    %v77 = vld [vmem:[#allocation5 + $0x4] sm:$0xf]
    %v78 = vld [vmem:[#allocation5 + $0x8] sm:$0xf]
    %v79 = vld [vmem:[#allocation5 + $0xc] sm:$0xf]
    %v80 = vld [vmem:[#allocation5 + $0x10] sm:$0xf]
    %v81 = vld [vmem:[#allocation5 + $0x14] sm:$0xf]
    %v82 = vld [vmem:[#allocation5 + $0x18] sm:$0xf]
    %v83 = vld [vmem:[#allocation5 + $0x1c] sm:$0xf]
    %v84 = vld [vmem:[#allocation5 + $0x20] sm:$0xf]
    %v85 = vld [vmem:[#allocation5 + $0x24] sm:$0xf]
    %v86 = vld [vmem:[#allocation5 + $0x28] sm:$0xf]
    %v87 = vld [vmem:[#allocation5 + $0x2c] sm:$0xf]
    %v88 = vld [vmem:[#allocation5 + $0x30] sm:$0xf]
    %v89 = vld [vmem:[#allocation5 + $0x34] sm:$0xf]
    %v90 = vld [vmem:[#allocation5 + $0x38] sm:$0xf]
    %v91 = vld [vmem:[#allocation5 + $0x3c] sm:$0xf]
    %92 = vset.pattern.permute.xlu0 1
    %93 = vperm.xlu0 %92, %v66
    %v94 = vpop.permute.xlu0 %93
    %vm95 = vcmp.eq.s32.totalorder %v68, %v94
    %v96 = vsel %vm95, 1, 0
    %v97 = vcvt.s32.f32 %v96
    %v98 = vpack.c.bf16 %v97, %v97
    %s99 = scalar_lea.vmem [#allocation5], 64
    %v100 = vld [vmem:[%s99] sm:$0xf]
    %v101 = vld [vmem:[%s99 + $0x4] sm:$0xf]
    %v102 = vld [vmem:[%s99 + $0x8] sm:$0xf]
    %v103 = vld [vmem:[%s99 + $0xc] sm:$0xf]
    %v104 = vld [vmem:[%s99 + $0x10] sm:$0xf]
    %v105 = vld [vmem:[%s99 + $0x14] sm:$0xf]
    %v106 = vld [vmem:[%s99 + $0x18] sm:$0xf]
    %v107 = vld [vmem:[%s99 + $0x1c] sm:$0xf]
    %v108 = vld [vmem:[%s99 + $0x20] sm:$0xf]
    %v109 = vld [vmem:[%s99 + $0x24] sm:$0xf]
    %v110 = vld [vmem:[%s99 + $0x28] sm:$0xf]
    %v111 = vld [vmem:[%s99 + $0x2c] sm:$0xf]
    %v112 = vld [vmem:[%s99 + $0x30] sm:$0xf]
    %v113 = vld [vmem:[%s99 + $0x34] sm:$0xf]
    %v114 = vld [vmem:[%s99 + $0x38] sm:$0xf]
    %v115 = vld [vmem:[%s99 + $0x3c] sm:$0xf]
    %v132 = vunpack.c.l.b16 %v100
    %v133 = vunpack.c.l.b16 %v101
    %v134 = vunpack.c.l.b16 %v102
    %v135 = vunpack.c.l.b16 %v103
    %v136 = vunpack.c.l.b16 %v104
    %v137 = vunpack.c.l.b16 %v105
    %v138 = vunpack.c.l.b16 %v106
    %v139 = vunpack.c.l.b16 %v107
    %v140 = vunpack.c.l.b16 %v108
    %v141 = vunpack.c.l.b16 %v109
    %v142 = vunpack.c.l.b16 %v110
    %v143 = vunpack.c.l.b16 %v111
    %v144 = vunpack.c.l.b16 %v112
    %v145 = vunpack.c.l.b16 %v113
    %v146 = vunpack.c.l.b16 %v114
    %v147 = vunpack.c.l.b16 %v115
    %v148 = vpack.c.b16 %v133, %v132
    %v149 = vpack.c.b16 %v135, %v134
    %v150 = vpack.c.b16 %v137, %v136
    %v151 = vpack.c.b16 %v139, %v138
    %v152 = vpack.c.b16 %v141, %v140
    %v153 = vpack.c.b16 %v143, %v142
    %v154 = vpack.c.b16 %v145, %v144
    %v155 = vpack.c.b16 %v147, %v146
    %164 = vmatpush.bf16.msra.mxu0 %v155
    %165 = vmatpush.bf16.msra.mxu0 %v154
    %166 = vmatpush.bf16.msra.mxu0 %v153
    %167 = vmatpush.bf16.msra.mxu0 %v152
    %168 = vmatpush.bf16.msra.mxu0 %v151
    %169 = vmatpush.bf16.msra.mxu0 %v150
    %170 = vmatpush.bf16.msra.mxu0 %v149
    %171 = vmatpush.bf16.msra.mxu0 %v148
    %172 = vmatmul.bf16.gmra.mxu0 %v98
    %v173 = vpop.f32.mrf.mxu0
    %v174 = vadd.f32 0.0, %v173
    %v175 = vpop.f32.mrf.mxu0
    %176 = vdwg.mxu0
    %v193 = vunpack.c.l.b16 %v76
    %v194 = vunpack.c.l.b16 %v77
    %v195 = vunpack.c.l.b16 %v78
    %v196 = vunpack.c.l.b16 %v79
    %v197 = vunpack.c.l.b16 %v80
    %v198 = vunpack.c.l.b16 %v81
    %v199 = vunpack.c.l.b16 %v82
    %v200 = vunpack.c.l.b16 %v83
    %v201 = vunpack.c.l.b16 %v84
    %v202 = vunpack.c.l.b16 %v85
    %v203 = vunpack.c.l.b16 %v86
    %v204 = vunpack.c.l.b16 %v87
    %v205 = vunpack.c.l.b16 %v88
    %v206 = vunpack.c.l.b16 %v89
    %v207 = vunpack.c.l.b16 %v90
    %v208 = vunpack.c.l.b16 %v91
    %v209 = vpack.c.b16 %v194, %v193
    %v210 = vpack.c.b16 %v196, %v195
    %v211 = vpack.c.b16 %v198, %v197
    %v212 = vpack.c.b16 %v200, %v199
    %v213 = vpack.c.b16 %v202, %v201
    %v214 = vpack.c.b16 %v204, %v203
    %v215 = vpack.c.b16 %v206, %v205
    %v216 = vpack.c.b16 %v208, %v207
    %225 = vmatpush.bf16.msra.mxu0 %v216
    %226 = vmatpush.bf16.msra.mxu0 %v215
    %227 = vmatpush.bf16.msra.mxu0 %v214
    %228 = vmatpush.bf16.msra.mxu0 %v213
    %229 = vmatpush.bf16.msra.mxu0 %v212
    %230 = vmatpush.bf16.msra.mxu0 %v211
    %231 = vmatpush.bf16.msra.mxu0 %v210
    %232 = vmatpush.bf16.msra.mxu0 %v209
    %233 = vmatmul.bf16.gmra.mxu0 %v75
    %v234 = vpop.f32.mrf.mxu0
    %v235 = vadd.f32 %v174, %v234
    %v236 = vpop.f32.mrf.mxu0
    %237 = vdwg.mxu0
    %238 = vset.pattern.permute.xlu0 2
    %239 = vperm.xlu0 %238, %v66
    %v240 = vpop.permute.xlu0 %239
    %vm241 = vcmp.eq.s32.totalorder %v68, %v240
    %v242 = vsel %vm241, 1, 0
    %v243 = vcvt.s32.f32 %v242
    %v244 = vpack.c.bf16 %v243, %v243
    %s245 = scalar_lea.vmem [#allocation5], 128
    %v246 = vld [vmem:[%s245] sm:$0xf]
    %v247 = vld [vmem:[%s245 + $0x4] sm:$0xf]
    %v248 = vld [vmem:[%s245 + $0x8] sm:$0xf]
    %v249 = vld [vmem:[%s245 + $0xc] sm:$0xf]
    %v250 = vld [vmem:[%s245 + $0x10] sm:$0xf]
    %v251 = vld [vmem:[%s245 + $0x14] sm:$0xf]
    %v252 = vld [vmem:[%s245 + $0x18] sm:$0xf]
    %v253 = vld [vmem:[%s245 + $0x1c] sm:$0xf]
    %v254 = vld [vmem:[%s245 + $0x20] sm:$0xf]
    %v255 = vld [vmem:[%s245 + $0x24] sm:$0xf]
    %v256 = vld [vmem:[%s245 + $0x28] sm:$0xf]
    %v257 = vld [vmem:[%s245 + $0x2c] sm:$0xf]
    %v258 = vld [vmem:[%s245 + $0x30] sm:$0xf]
    %v259 = vld [vmem:[%s245 + $0x34] sm:$0xf]
    %v260 = vld [vmem:[%s245 + $0x38] sm:$0xf]
    %v261 = vld [vmem:[%s245 + $0x3c] sm:$0xf]
    %v278 = vunpack.c.l.b16 %v246
    %v279 = vunpack.c.l.b16 %v247
    %v280 = vunpack.c.l.b16 %v248
    %v281 = vunpack.c.l.b16 %v249
    %v282 = vunpack.c.l.b16 %v250
    %v283 = vunpack.c.l.b16 %v251
    %v284 = vunpack.c.l.b16 %v252
    %v285 = vunpack.c.l.b16 %v253
    %v286 = vunpack.c.l.b16 %v254
    %v287 = vunpack.c.l.b16 %v255
    %v288 = vunpack.c.l.b16 %v256
    %v289 = vunpack.c.l.b16 %v257
    %v290 = vunpack.c.l.b16 %v258
    %v291 = vunpack.c.l.b16 %v259
    %v292 = vunpack.c.l.b16 %v260
    %v293 = vunpack.c.l.b16 %v261
    %v294 = vpack.c.b16 %v279, %v278
    %v295 = vpack.c.b16 %v281, %v280
    %v296 = vpack.c.b16 %v283, %v282
    %v297 = vpack.c.b16 %v285, %v284
    %v298 = vpack.c.b16 %v287, %v286
    %v299 = vpack.c.b16 %v289, %v288
    %v300 = vpack.c.b16 %v291, %v290
    %v301 = vpack.c.b16 %v293, %v292
    %310 = vmatpush.bf16.msra.mxu0 %v301
    %311 = vmatpush.bf16.msra.mxu0 %v300
    %312 = vmatpush.bf16.msra.mxu0 %v299
    %313 = vmatpush.bf16.msra.mxu0 %v298
    %314 = vmatpush.bf16.msra.mxu0 %v297
    %315 = vmatpush.bf16.msra.mxu0 %v296
    %316 = vmatpush.bf16.msra.mxu0 %v295
    %317 = vmatpush.bf16.msra.mxu0 %v294
    %318 = vmatmul.bf16.gmra.mxu0 %v244
    %v319 = vpop.f32.mrf.mxu0
    %v320 = vadd.f32 0.0, %v319
    %v321 = vpop.f32.mrf.mxu0
    %322 = vdwg.mxu0
    %v323 = vadd.f32 %v235, %v320
    %324 = vset.pattern.permute.xlu0 3
    %325 = vperm.xlu0 %324, %v66
    %v326 = vpop.permute.xlu0 %325
    %vm327 = vcmp.eq.s32.totalorder %v68, %v326
    %v328 = vsel %vm327, 1, 0
    %v329 = vcvt.s32.f32 %v328
    %v330 = vpack.c.bf16 %v329, %v329
    %s331 = scalar_lea.vmem [#allocation5], 192
    %v332 = vld [vmem:[%s331] sm:$0xf]
    %v333 = vld [vmem:[%s331 + $0x4] sm:$0xf]
    %v334 = vld [vmem:[%s331 + $0x8] sm:$0xf]
    %v335 = vld [vmem:[%s331 + $0xc] sm:$0xf]
    %v336 = vld [vmem:[%s331 + $0x10] sm:$0xf]
    %v337 = vld [vmem:[%s331 + $0x14] sm:$0xf]
    %v338 = vld [vmem:[%s331 + $0x18] sm:$0xf]
    %v339 = vld [vmem:[%s331 + $0x1c] sm:$0xf]
    %v340 = vld [vmem:[%s331 + $0x20] sm:$0xf]
    %v341 = vld [vmem:[%s331 + $0x24] sm:$0xf]
    %v342 = vld [vmem:[%s331 + $0x28] sm:$0xf]
    %v343 = vld [vmem:[%s331 + $0x2c] sm:$0xf]
    %v344 = vld [vmem:[%s331 + $0x30] sm:$0xf]
    %v345 = vld [vmem:[%s331 + $0x34] sm:$0xf]
    %v346 = vld [vmem:[%s331 + $0x38] sm:$0xf]
    %v347 = vld [vmem:[%s331 + $0x3c] sm:$0xf]
    %v364 = vunpack.c.l.b16 %v332
    %v365 = vunpack.c.l.b16 %v333
    %v366 = vunpack.c.l.b16 %v334
    %v367 = vunpack.c.l.b16 %v335
    %v368 = vunpack.c.l.b16 %v336
    %v369 = vunpack.c.l.b16 %v337
    %v370 = vunpack.c.l.b16 %v338
    %v371 = vunpack.c.l.b16 %v339
    %v372 = vunpack.c.l.b16 %v340
    %v373 = vunpack.c.l.b16 %v341
    %v374 = vunpack.c.l.b16 %v342
    %v375 = vunpack.c.l.b16 %v343
    %v376 = vunpack.c.l.b16 %v344
    %v377 = vunpack.c.l.b16 %v345
    %v378 = vunpack.c.l.b16 %v346
    %v379 = vunpack.c.l.b16 %v347
    %v380 = vpack.c.b16 %v365, %v364
    %v381 = vpack.c.b16 %v367, %v366
    %v382 = vpack.c.b16 %v369, %v368
    %v383 = vpack.c.b16 %v371, %v370
    %v384 = vpack.c.b16 %v373, %v372
    %v385 = vpack.c.b16 %v375, %v374
    %v386 = vpack.c.b16 %v377, %v376
    %v387 = vpack.c.b16 %v379, %v378
    %396 = vmatpush.bf16.msra.mxu0 %v387
    %397 = vmatpush.bf16.msra.mxu0 %v386
    %398 = vmatpush.bf16.msra.mxu0 %v385
    %399 = vmatpush.bf16.msra.mxu0 %v384
    %400 = vmatpush.bf16.msra.mxu0 %v383
    %401 = vmatpush.bf16.msra.mxu0 %v382
    %402 = vmatpush.bf16.msra.mxu0 %v381
    %403 = vmatpush.bf16.msra.mxu0 %v380
    %404 = vmatmul.bf16.gmra.mxu0 %v330
    %v405 = vpop.f32.mrf.mxu0
    %v406 = vadd.f32 0.0, %v405
    %v407 = vpop.f32.mrf.mxu0
    %408 = vdwg.mxu0
    %v409 = vadd.f32 %v323, %v406
    %410 = vset.pattern.permute.xlu0 4
    %411 = vperm.xlu0 %410, %v66
    %v412 = vpop.permute.xlu0 %411
    %vm413 = vcmp.eq.s32.totalorder %v68, %v412
    %v414 = vsel %vm413, 1, 0
    %v415 = vcvt.s32.f32 %v414
    %v416 = vpack.c.bf16 %v415, %v415
    %s417 = scalar_lea.vmem [#allocation5], 256
    %v418 = vld [vmem:[%s417] sm:$0xf]
    %v419 = vld [vmem:[%s417 + $0x4] sm:$0xf]
    %v420 = vld [vmem:[%s417 + $0x8] sm:$0xf]
    %v421 = vld [vmem:[%s417 + $0xc] sm:$0xf]
    %v422 = vld [vmem:[%s417 + $0x10] sm:$0xf]
    %v423 = vld [vmem:[%s417 + $0x14] sm:$0xf]
    %v424 = vld [vmem:[%s417 + $0x18] sm:$0xf]
    %v425 = vld [vmem:[%s417 + $0x1c] sm:$0xf]
    %v426 = vld [vmem:[%s417 + $0x20] sm:$0xf]
    %v427 = vld [vmem:[%s417 + $0x24] sm:$0xf]
    %v428 = vld [vmem:[%s417 + $0x28] sm:$0xf]
    %v429 = vld [vmem:[%s417 + $0x2c] sm:$0xf]
    %v430 = vld [vmem:[%s417 + $0x30] sm:$0xf]
    %v431 = vld [vmem:[%s417 + $0x34] sm:$0xf]
    %v432 = vld [vmem:[%s417 + $0x38] sm:$0xf]
    %v433 = vld [vmem:[%s417 + $0x3c] sm:$0xf]
    %v450 = vunpack.c.l.b16 %v418
    %v451 = vunpack.c.l.b16 %v419
    %v452 = vunpack.c.l.b16 %v420
    %v453 = vunpack.c.l.b16 %v421
    %v454 = vunpack.c.l.b16 %v422
    %v455 = vunpack.c.l.b16 %v423
    %v456 = vunpack.c.l.b16 %v424
    %v457 = vunpack.c.l.b16 %v425
    %v458 = vunpack.c.l.b16 %v426
    %v459 = vunpack.c.l.b16 %v427
    %v460 = vunpack.c.l.b16 %v428
    %v461 = vunpack.c.l.b16 %v429
    %v462 = vunpack.c.l.b16 %v430
    %v463 = vunpack.c.l.b16 %v431
    %v464 = vunpack.c.l.b16 %v432
    %v465 = vunpack.c.l.b16 %v433
    %v466 = vpack.c.b16 %v451, %v450
    %v467 = vpack.c.b16 %v453, %v452
    %v468 = vpack.c.b16 %v455, %v454
    %v469 = vpack.c.b16 %v457, %v456
    %v470 = vpack.c.b16 %v459, %v458
    %v471 = vpack.c.b16 %v461, %v460
    %v472 = vpack.c.b16 %v463, %v462
    %v473 = vpack.c.b16 %v465, %v464
    %482 = vmatpush.bf16.msra.mxu0 %v473
    %483 = vmatpush.bf16.msra.mxu0 %v472
    %484 = vmatpush.bf16.msra.mxu0 %v471
    %485 = vmatpush.bf16.msra.mxu0 %v470
    %486 = vmatpush.bf16.msra.mxu0 %v469
    %487 = vmatpush.bf16.msra.mxu0 %v468
    %488 = vmatpush.bf16.msra.mxu0 %v467
    %489 = vmatpush.bf16.msra.mxu0 %v466
    %490 = vmatmul.bf16.gmra.mxu0 %v416
    %v491 = vpop.f32.mrf.mxu0
    %v492 = vadd.f32 0.0, %v491
    %v493 = vpop.f32.mrf.mxu0
    %494 = vdwg.mxu0
    %v495 = vadd.f32 %v409, %v492
    %496 = vset.pattern.permute.xlu0 5
    %497 = vperm.xlu0 %496, %v66
    %v498 = vpop.permute.xlu0 %497
    %vm499 = vcmp.eq.s32.totalorder %v68, %v498
    %v500 = vsel %vm499, 1, 0
    %v501 = vcvt.s32.f32 %v500
    %v502 = vpack.c.bf16 %v501, %v501
    %s503 = scalar_lea.vmem [#allocation5], 320
    %v504 = vld [vmem:[%s503] sm:$0xf]
    %v505 = vld [vmem:[%s503 + $0x4] sm:$0xf]
    %v506 = vld [vmem:[%s503 + $0x8] sm:$0xf]
    %v507 = vld [vmem:[%s503 + $0xc] sm:$0xf]
    %v508 = vld [vmem:[%s503 + $0x10] sm:$0xf]
    %v509 = vld [vmem:[%s503 + $0x14] sm:$0xf]
    %v510 = vld [vmem:[%s503 + $0x18] sm:$0xf]
    %v511 = vld [vmem:[%s503 + $0x1c] sm:$0xf]
    %v512 = vld [vmem:[%s503 + $0x20] sm:$0xf]
    %v513 = vld [vmem:[%s503 + $0x24] sm:$0xf]
    %v514 = vld [vmem:[%s503 + $0x28] sm:$0xf]
    %v515 = vld [vmem:[%s503 + $0x2c] sm:$0xf]
    %v516 = vld [vmem:[%s503 + $0x30] sm:$0xf]
    %v517 = vld [vmem:[%s503 + $0x34] sm:$0xf]
    %v518 = vld [vmem:[%s503 + $0x38] sm:$0xf]
    %v519 = vld [vmem:[%s503 + $0x3c] sm:$0xf]
    %v536 = vunpack.c.l.b16 %v504
    %v537 = vunpack.c.l.b16 %v505
    %v538 = vunpack.c.l.b16 %v506
    %v539 = vunpack.c.l.b16 %v507
    %v540 = vunpack.c.l.b16 %v508
    %v541 = vunpack.c.l.b16 %v509
    %v542 = vunpack.c.l.b16 %v510
    %v543 = vunpack.c.l.b16 %v511
    %v544 = vunpack.c.l.b16 %v512
    %v545 = vunpack.c.l.b16 %v513
    %v546 = vunpack.c.l.b16 %v514
    %v547 = vunpack.c.l.b16 %v515
    %v548 = vunpack.c.l.b16 %v516
    %v549 = vunpack.c.l.b16 %v517
    %v550 = vunpack.c.l.b16 %v518
    %v551 = vunpack.c.l.b16 %v519
    %v552 = vpack.c.b16 %v537, %v536
    %v553 = vpack.c.b16 %v539, %v538
    %v554 = vpack.c.b16 %v541, %v540
    %v555 = vpack.c.b16 %v543, %v542
    %v556 = vpack.c.b16 %v545, %v544
    %v557 = vpack.c.b16 %v547, %v546
    %v558 = vpack.c.b16 %v549, %v548
    %v559 = vpack.c.b16 %v551, %v550
    %568 = vmatpush.bf16.msra.mxu0 %v559
    %569 = vmatpush.bf16.msra.mxu0 %v558
    %570 = vmatpush.bf16.msra.mxu0 %v557
    %571 = vmatpush.bf16.msra.mxu0 %v556
    %572 = vmatpush.bf16.msra.mxu0 %v555
    %573 = vmatpush.bf16.msra.mxu0 %v554
    %574 = vmatpush.bf16.msra.mxu0 %v553
    %575 = vmatpush.bf16.msra.mxu0 %v552
    %576 = vmatmul.bf16.gmra.mxu0 %v502
    %v577 = vpop.f32.mrf.mxu0
    %v578 = vadd.f32 0.0, %v577
    %v579 = vpop.f32.mrf.mxu0
    %580 = vdwg.mxu0
    %v581 = vadd.f32 %v495, %v578
    %v582 = vld [vmem:[%s2] sm:$0x1]
    %v584 = vperm.slane %v582, 0
    %v586 = vadd.f32 %v581, %v584
    %v587 = vmax.f32 %v586, 0.0
    %v588 = vpack.c.bf16 %v587, %v587
    %v589 = vld [vmem:[#allocation7] sm:$0xf]
    %v590 = vld [vmem:[#allocation7 + $0x4] sm:$0xf]
    %v591 = vld [vmem:[#allocation7 + $0x8] sm:$0xf]
    %v592 = vld [vmem:[#allocation7 + $0xc] sm:$0xf]
    %v593 = vld [vmem:[#allocation7 + $0x10] sm:$0xf]
    %v594 = vld [vmem:[#allocation7 + $0x14] sm:$0xf]
    %v595 = vld [vmem:[#allocation7 + $0x18] sm:$0xf]
    %v596 = vld [vmem:[#allocation7 + $0x1c] sm:$0xf]
    %v597 = vld [vmem:[#allocation7 + $0x20] sm:$0xf]
    %v598 = vld [vmem:[#allocation7 + $0x24] sm:$0xf]
    %v599 = vld [vmem:[#allocation7 + $0x28] sm:$0xf]
    %v600 = vld [vmem:[#allocation7 + $0x2c] sm:$0xf]
    %v601 = vld [vmem:[#allocation7 + $0x30] sm:$0xf]
    %v602 = vld [vmem:[#allocation7 + $0x34] sm:$0xf]
    %v603 = vld [vmem:[#allocation7 + $0x38] sm:$0xf]
    %v604 = vld [vmem:[#allocation7 + $0x3c] sm:$0xf]
    %v605 = vld [vmem:[%s4] sm:$0x1]
    %v607 = vperm.slane %v605, 0
    %v625 = vunpack.c.l.b16 %v589
    %v626 = vunpack.c.l.b16 %v590
    %v627 = vunpack.c.l.b16 %v591
    %v628 = vunpack.c.l.b16 %v592
    %v629 = vunpack.c.l.b16 %v593
    %v630 = vunpack.c.l.b16 %v594
    %v631 = vunpack.c.l.b16 %v595
    %v632 = vunpack.c.l.b16 %v596
    %v633 = vunpack.c.l.b16 %v597
    %v634 = vunpack.c.l.b16 %v598
    %v635 = vunpack.c.l.b16 %v599
    %v636 = vunpack.c.l.b16 %v600
    %v637 = vunpack.c.l.b16 %v601
    %v638 = vunpack.c.l.b16 %v602
    %v639 = vunpack.c.l.b16 %v603
    %v640 = vunpack.c.l.b16 %v604
    %v641 = vpack.c.b16 %v626, %v625
    %v642 = vpack.c.b16 %v628, %v627
    %v643 = vpack.c.b16 %v630, %v629
    %v644 = vpack.c.b16 %v632, %v631
    %v645 = vpack.c.b16 %v634, %v633
    %v646 = vpack.c.b16 %v636, %v635
    %v647 = vpack.c.b16 %v638, %v637
    %v648 = vpack.c.b16 %v640, %v639
    %657 = vmatpush.bf16.msra.mxu0 %v648
    %658 = vmatpush.bf16.msra.mxu0 %v647
    %659 = vmatpush.bf16.msra.mxu0 %v646
    %660 = vmatpush.bf16.msra.mxu0 %v645
    %661 = vmatpush.bf16.msra.mxu0 %v644
    %662 = vmatpush.bf16.msra.mxu0 %v643
    %663 = vmatpush.bf16.msra.mxu0 %v642
    %664 = vmatpush.bf16.msra.mxu0 %v641
    %665 = vmatmul.bf16.gmra.mxu0 %v588
    %v666 = vpop.f32.mrf.mxu0
    %v667 = vadd.f32 %v607, %v666
    %v668 = vpop.f32.mrf.mxu0
    %669 = vdwg.mxu0
    %670 = vst [vmem:[#allocation8] sm:$0xff] %v667
    // Predicated region
    $region34: #{dependency_model_forward.1} parent=1 // pred_check
      _
    $region35: #{dependency_model_forward.1} parent=1 // pred_check_branch
      %672 = sbr.rel (0) target = $region37
    $region36: #{dependency_model_forward.1} parent=1 // pred_region
      %674 = vsyncadd [#allocation4], 0
      %s676 = sshll.u32 [#allocation8], 4
      %s677 = int_to_ptr.vmem [resolvable:$true] %s676
      %s678 = sshll.u32 %s5, 4
      %s679 = int_to_ptr.hbm [resolvable:$true] %s678
      %681 = dma.vmem_to_hbm [thread:$0]  %s677, 128, %s679, [#allocation4]
    $region37: #{dependency_model_forward.1} parent=1 // pred_fallthru
      _
    // Predicated region
    $region38: #{dependency_model_forward.1} parent=1 // pred_check
      _
    $region39: #{dependency_model_forward.1} parent=1 // pred_check_branch
      %683 = sbr.rel (0) target = $region41
    $region40: #{dependency_model_forward.1} parent=1 // pred_region
      %685 = dma.done [#allocation4], 128
    $region41: #{dependency_model_forward.1} parent=1 // pred_fallthru
      _
    %686 = vsyncpa [#allocation3], 1
    %687 = vsyncpa [#allocation6], 1
    %688 = vsyncpa [#allocation4], 1

</llo_original>
